<compile_context>
chip_gen: v6e
topology: v6e:2x2x1
jax: 0.10.0
libtpu: 0.0.40
codegen_flags: <defaults>
</compile_context>

<pallas_src>
import numpy as np
import jax
import jax.numpy as jnp
from jax.experimental import pallas as pl
from jax.experimental.pallas import tpu as pltpu


# ---------------------------------------------------------------------------
# Static (trace-time, numpy) index math replicating the PyTorch module.
# ---------------------------------------------------------------------------
def _pad_amounts(out_size: int, in_size: int):
    """Replicates the module's left/right (or top/bot) split logic."""
    diff = out_size - in_size
    if diff == 0:
        return 0, 0
    a = int(diff / 2)
    b = int(diff - a)
    return a, b


def _src_indices(out_size: int, up_size: int, lo_pad: int, in_size: int):
    """For each output coordinate, the source index into the *original* x2.

    Composition of: reflection pad (on the upsampled tensor of size up_size)
    followed (backwards) by nearest-upsample-by-2 (src = up_idx // 2).
    """
    o = np.arange(out_size)
    pos = o - lo_pad
    # single reflection (pad < up_size always holds for this module's use)
    pos = np.where(pos < 0, -pos, pos)
    pos = np.where(pos >= up_size, 2 * (up_size - 1) - pos, pos)
    src = pos // 2
    assert np.all((src >= 0) & (src < in_size)), "pad larger than upsampled size"
    return src.astype(np.int32)


def _pick_row_block(B: int, candidates):
    """Largest candidate (multiple of 8) dividing B that leaves >=2 grid
    blocks (so both v7x TensorCores get work). Falls back to a single block."""
    for cand in candidates:
        if cand <= B and B % cand == 0 and B // cand >= 2:
            return cand
    return B


# ---------------------------------------------------------------------------
# Kernels
# ---------------------------------------------------------------------------
def _fused_gather_kernel(x_ref, rt_ref, o_ref):
    # x: (Bb, K)  rt: (K, M)  o: (Bb, M)   K = H2*W2, M = H1*W1 (lane dense)
    o_ref[...] = jnp.dot(
        x_ref[...], rt_ref[...], preferred_element_type=jnp.float32
    ).astype(o_ref.dtype)


def _separable_gather_kernel(x_ref, rwt_ref, rh_ref, o_ref):
    # x: (Bb, H2, W2)  rwt: (W2, W1)  rh: (H1, H2)  o: (Bb, H1, W1)
    Bb, H2, W2 = x_ref.shape
    W1 = rwt_ref.shape[1]
    # Column (W) gather first: one collapsed matmul -> lane-dense intermediate.
    x2d = x_ref[...].reshape(Bb * H2, W2)
    y = jnp.dot(x2d, rwt_ref[...], preferred_element_type=jnp.float32)
    # 0/1 weights => every element of y equals exactly one input element, so
    # casting back to the native dtype is exact.
    y = y.reshape(Bb, H2, W1).astype(x_ref.dtype)
    rh = rh_ref[...]
    # Row (H) gather per plane; Bb is small so static unroll is fine and it
    # avoids any in-kernel transpose.
    for i in range(Bb):
        o_ref[i] = jnp.dot(
            rh, y[i], preferred_element_type=jnp.float32
        ).astype(o_ref.dtype)


# ---------------------------------------------------------------------------
# Wrapper
# ---------------------------------------------------------------------------
_FUSED_RT_MAX_BYTES = 2 * 1024 * 1024  # keep the fused R^T comfortably in VMEM


def upsample_reshape_eval(x1, x2, *, force_separable: bool = False):
    """x1: (N, C, H1, W1) reference-shape tensor. x2: (N, C, H2, W2).
    Returns upsampled + reflection-padded x2 of shape (N, C, H1, W1)."""
    N, C, H1, W1 = x1.shape
    N2, C2, H2, W2 = x2.shape
    assert (N, C) == (N2, C2)

    Hu, Wu = 2 * H2, 2 * W2
    left, right = _pad_amounts(W1, Wu)
    top, bot = _pad_amounts(H1, Hu)
    assert left + right + Wu == W1 and top + bot + Hu == H1

    h_src = _src_indices(H1, Hu, top, H2)    # (H1,)
    w_src = _src_indices(W1, Wu, left, W2)   # (W1,)

    B = N * C
    K = H2 * W2
    M = H1 * W1
    dt = x2.dtype
    itemsize = jnp.dtype(dt).itemsize

    use_fused = (not force_separable) and (K * M * itemsize <= _FUSED_RT_MAX_BYTES)

    if use_fused:
        # Fused one-hot selection matrix; out = x2_flat @ R^T  (lane-dense M).
        src_flat = (h_src[:, None] * W2 + w_src[None, :]).reshape(-1)  # (M,)
        rt_np = np.zeros((K, M), dtype=np.float32)
        rt_np[src_flat, np.arange(M)] = 1.0
        rt = jnp.asarray(rt_np, dtype=dt)            # exact 0/1 weights

        x2_flat = x2.reshape(B, K)                   # native dtype, no upcast
        Bb = _pick_row_block(B, (256, 128, 64, 32, 16, 8))
        grid = (B // Bb,)

        out = pl.pallas_call(
            _fused_gather_kernel,
            out_shape=jax.ShapeDtypeStruct((B, M), dt),
            grid_spec=pltpu.PrefetchScalarGridSpec(
                num_scalar_prefetch=0,
                grid=grid,
                in_specs=[
                    pl.BlockSpec((Bb, K), lambda b: (b, 0)),
                    pl.BlockSpec((K, M), lambda b: (0, 0)),
                ],
                out_specs=pl.BlockSpec((Bb, M), lambda b: (b, 0)),
            ),
            compiler_params=pltpu.CompilerParams(
                dimension_semantics=("parallel",)),
        )(x2_flat, rt)
        return out.reshape(N, C, H1, W1)

    # ---- separable two-sided gather: out[b] = Rh @ x2[b] @ Rw^T -------------
    rwt_np = np.zeros((W2, W1), dtype=np.float32)
    rwt_np[w_src, np.arange(W1)] = 1.0
    rh_np = np.zeros((H1, H2), dtype=np.float32)
    rh_np[np.arange(H1), h_src] = 1.0
    rwt = jnp.asarray(rwt_np, dtype=dt)
    rh = jnp.asarray(rh_np, dtype=dt)

    x2_b = x2.reshape(B, H2, W2)
    Bb = _pick_row_block(B, (16, 8))                 # keep VMEM small for big planes
    grid = (B // Bb,)

    out = pl.pallas_call(
        _separable_gather_kernel,
        out_shape=jax.ShapeDtypeStruct((B, H1, W1), dt),
        grid_spec=pltpu.PrefetchScalarGridSpec(
            num_scalar_prefetch=0,
            grid=grid,
            in_specs=[
                pl.BlockSpec((Bb, H2, W2), lambda b: (b, 0, 0)),
                pl.BlockSpec((W2, W1), lambda b: (0, 0)),
                pl.BlockSpec((H1, H2), lambda b: (0, 0)),
            ],
            out_specs=pl.BlockSpec((Bb, H1, W1), lambda b: (b, 0, 0)),
        ),
        compiler_params=pltpu.CompilerParams(
            dimension_semantics=("parallel",)),
    )(x2_b, rwt, rh)
    return out.reshape(N, C, H1, W1)


# ---------------------------------------------------------------------------
# Pure-JAX reference for correctness check.
# ---------------------------------------------------------------------------
def _reference(x1, x2):
    N, C, H1, W1 = x1.shape
    _, _, H2, W2 = x2.shape
    Hu, Wu = 2 * H2, 2 * W2
    left, _ = _pad_amounts(W1, Wu)
    top, _ = _pad_amounts(H1, Hu)
    h_src = _src_indices(H1, Hu, top, H2)
    w_src = _src_indices(W1, Wu, left, W2)
    return x2[:, :, h_src[:, None], w_src[None, :]]


if __name__ == "__main__":
    key = jax.random.PRNGKey(0)
    k1, k2 = jax.random.split(key)
    # x1 only supplies the target spatial shape; 18x18 so the 2x upsample
    # (8 -> 16) requires 1 pixel of reflection padding per side.
    # N*C = 16 so the kernel runs with 2 parallel grid blocks of 8 planes.
    x1 = jax.random.normal(k1, (2, 8, 18, 18), dtype=jnp.float32)
    x2 = jax.random.normal(k2, (2, 8, 8, 8), dtype=jnp.float32)

    ref = _reference(x1, x2)

    # Default (fused selection-matrix) path.
    out_fused = jax.block_until_ready(upsample_reshape_eval(x1, x2))
    assert out_fused.shape == (2, 8, 18, 18)
    np.testing.assert_allclose(np.asarray(out_fused), np.asarray(ref),
                               rtol=1e-6, atol=1e-6)

    # Exercise the large-plane separable fallback on the same small shapes.
    out_sep = jax.block_until_ready(
        upsample_reshape_eval(x1, x2, force_separable=True))
    np.testing.assert_allclose(np.asarray(out_sep), np.asarray(ref),
                               rtol=1e-6, atol=1e-6)

    print("KERNEL_OK")
</pallas_src>

<mosaic_0001>
module attributes {stable_mosaic.version = 11 : i64} {
  func.func @_fused_gather_kernel(%arg0: i32, %arg1: memref<8x64xf32, #tpu.memory_space<vmem>>, %arg2: memref<64x324xf32, #tpu.memory_space<vmem>>, %arg3: memref<8x324xf32, #tpu.memory_space<vmem>>) attributes {dimension_semantics = [#tpu.dimension_semantics<parallel>], iteration_bounds = array<i64: 2>, scalar_prefetch = 0 : i64, scratch_operands = 0 : i64, tpu.core_type = #tpu.core_type<tc>, window_params = [{transform_indices = @transform_0, window_bounds = array<i64: 8, 64>}, {pipeline_mode = #tpu.pipeline_mode<synchronous>, transform_indices = @transform_1, window_bounds = array<i64: 64, 324>}, {transform_indices = @transform_2, window_bounds = array<i64: 8, 324>}]} {
    %c0 = arith.constant 0 : index
    %c0_0 = arith.constant 0 : index
    %0 = vector.load %arg1[%c0, %c0_0] : memref<8x64xf32, #tpu.memory_space<vmem>>, vector<8x64xf32>
    %c0_1 = arith.constant 0 : index
    %c0_2 = arith.constant 0 : index
    %1 = vector.load %arg2[%c0_1, %c0_2] : memref<64x324xf32, #tpu.memory_space<vmem>>, vector<64x324xf32>
    %cst = arith.constant dense<0.000000e+00> : vector<8x324xf32>
    %2 = tpu.matmul %0, %1, %cst {dimension_numbers = #tpu.dot_dimension_numbers<[1], [0], [0], [1], [0, 0, 1, 1], [], []>} : vector<8x64xf32>, vector<64x324xf32>, vector<8x324xf32> -> vector<8x324xf32>
    %c0_3 = arith.constant 0 : index
    %c0_4 = arith.constant 0 : index
    %3 = vector.load %arg3[%c0_3, %c0_4] : memref<8x324xf32, #tpu.memory_space<vmem>>, vector<8x324xf32>
    tpu.vector_store %arg3[%c0_3, %c0_4], %2 {strides = array<i32>} : memref<8x324xf32, #tpu.memory_space<vmem>>, vector<8x324xf32>,
    return
  }
  func.func @transform_0(%arg0: i32) -> (i32, i32) {
    %c0_i32 = arith.constant 0 : i32
    %c0_i32_0 = arith.constant 0 : i32
    return %arg0, %c0_i32 : i32, i32
  }
  func.func @transform_1(%arg0: i32) -> (i32, i32) {
    %c0_i32 = arith.constant 0 : i32
    %c0_i32_0 = arith.constant 0 : i32
    %c0_i32_1 = arith.constant 0 : i32
    return %c0_i32, %c0_i32_0 : i32, i32
  }
  func.func @transform_2(%arg0: i32) -> (i32, i32) {
    %c0_i32 = arith.constant 0 : i32
    %c0_i32_0 = arith.constant 0 : i32
    return %arg0, %c0_i32 : i32, i32
  }
}

</mosaic_0001>

<llo_original>
// kernel: tpu_custom_call.1
$region0: #{tpu_custom_call.1}
  #allocation0 [shape = 'u32[]', space=smem, size = 0x4, offset = 0x4, fixed_abs, tag = 'smem constant byte address 0x4 - core index']
  #allocation1 [shape = 'u32[144,128]{1,0:T(1,128)}', space=vmem, size = 0x12000, scoped, tag = 'internal scratch']
  %s0 = inlined_call_operand.hbm [shape: f32[16,64], index: 0, kind: input, shape index: {}]
  %s1 = inlined_call_operand.hbm [shape: f32[64,324], index: 1, kind: input, shape index: {}]
  %s2 = inlined_call_operand.hbm [shape: f32[16,324], index: 2, kind: output, shape index: {}]
  %s3 = sld [smem:[#allocation0]]
  $region49: #{tpu_custom_call.1} parent=0
    _
  %s5 = ssub.s32 1, %s3
  %s6 = scalar_select 0, %s5, %s3
  $region1: #{tpu_custom_call.1} parent=0
    #allocation2 [shape = 'u8[8192]{0}', space=vmem, size = 0x2000, scoped, tag = 'input window, operand 0']
    #allocation3 [shape = 's32[2]{0}', space=sflag, size = 0x8, scoped, tag = 'scoped memory for tpu_custom_call.1']
    #allocation4 [shape = 's32[2]{0}', space=sflag, size = 0x8, scoped, tag = 'scoped memory for tpu_custom_call.1']
    #allocation5 [shape = 'u8[98304]{0}', space=vmem, size = 0x18000, scoped, tag = 'input window, operand 1, single buffered']
    #allocation6 [shape = 's32[1]{0}', space=sflag, size = 0x4, scoped, tag = 'scoped memory for tpu_custom_call.1']
    #allocation7 [shape = 'u8[24576]{0}', space=vmem, size = 0x6000, scoped, tag = 'output window, operand 0']
    %7 = vsyncpa [#allocation3], 0
    %s8 = scalar_lea.sflag [#allocation3], 1
    %9 = vsyncpa %s8, 0
    %10 = vsyncpa [#allocation6], 0
    %11 = vsyncpa [#allocation4], 0
    %s12 = scalar_lea.sflag [#allocation4], 1
    %13 = vsyncpa %s12, 0
    loop: start=0, step=1, limit=4
    $region2: #{tpu_custom_call.1} parent=1 // loop_pre_header
      _
    $region3: #{tpu_custom_call.1} parent=1 // loop_header
      %s15 = sphi 0, %s19
      %p16 = scmp.ge.s32.totalorder %s15, 4
      %s25 = sphi 0, %s27
      %s28 = sphi 0, %s25
      %s29 = sphi 0, %s28
      %s45 = sphi 0, %s29
      %s49 = sphi 0, %s49
      %s51 = sphi 0, %s49
      %s52 = sphi 0, %s51
      %s66 = sphi 0, %s52
      %s72 = sphi 0, %s74
      %s75 = sphi 0, %s72
      %s76 = sphi 0, %s75
      %s92 = sphi 0, %s76
    $region4: #{tpu_custom_call.1} parent=1 // loop_header_branch
      %18 = sbr.rel (%p16) target = $region8
    $region5: #{tpu_custom_call.1} parent=1 // loop_body
      %s20 = ssub.s32 %s15, 1
      %s21 = ssub.s32 %s15, 2
      %s22 = sadd.s32 %s15, 1
      %s23 = ssub.s32 %s15, %s22
      %p24 = scmp.eq.s32.totalorder %s23, 0
      %s26 = sadd.s32 %s25, 1
      %s27 = scalar_select %p24, %s25, %s26
      %p30 = pneg %p24
      %p31 = scmp.eq.s32.totalorder %s15, 1
      %p32 = por %p30, %p31
      %p33 = scmp.ne.s32.totalorder %s25, %s28
      %p34 = scmp.eq.s32.totalorder %s15, 0
      %p35 = por %p33, %p34
      %p36 = scmp.ne.s32.totalorder %s25, %s28
      %p37 = scmp.eq.s32.totalorder %s20, 1
      %p38 = por %p36, %p37
      %p39 = scmp.ne.s32.totalorder %s28, %s29
      %p40 = scmp.eq.s32.totalorder %s20, 0
      %p41 = por %p39, %p40
      %p42 = scmp.ne.s32.totalorder %s28, %s29
      %p43 = scmp.eq.s32.totalorder %s21, 1
      %p44 = por %p42, %p43
      %p46 = scmp.ne.s32.totalorder %s29, %s45
      %p47 = scmp.eq.s32.totalorder %s21, 0
      %p48 = por %p46, %p47
      %s50 = sadd.s32 %s49, 1
      %p53 = scmp.eq.s32.totalorder %s15, 1
      %p54 = scmp.ne.s32.totalorder %s49, %s51
      %p55 = scmp.eq.s32.totalorder %s15, 0
      %p56 = por %p54, %p55
      %p57 = scmp.ne.s32.totalorder %s49, %s51
      %p58 = scmp.eq.s32.totalorder %s20, 1
      %p59 = por %p57, %p58
      %p60 = scmp.ne.s32.totalorder %s51, %s52
      %p61 = scmp.eq.s32.totalorder %s20, 0
      %p62 = por %p60, %p61
      %p63 = scmp.ne.s32.totalorder %s51, %s52
      %p64 = scmp.eq.s32.totalorder %s21, 1
      %p65 = por %p63, %p64
      %p67 = scmp.ne.s32.totalorder %s52, %s66
      %p68 = scmp.eq.s32.totalorder %s21, 0
      %p69 = por %p67, %p68
      %s70 = ssub.s32 %s15, %s22
      %p71 = scmp.eq.s32.totalorder %s70, 0
      %s73 = sadd.s32 %s72, 1
      %s74 = scalar_select %p71, %s72, %s73
      %p77 = pneg %p71
      %p78 = scmp.eq.s32.totalorder %s15, 1
      %p79 = por %p77, %p78
      %p80 = scmp.ne.s32.totalorder %s72, %s75
      %p81 = scmp.eq.s32.totalorder %s15, 0
      %p82 = por %p80, %p81
      %p83 = scmp.ne.s32.totalorder %s72, %s75
      %p84 = scmp.eq.s32.totalorder %s20, 1
      %p85 = por %p83, %p84
      %p86 = scmp.ne.s32.totalorder %s75, %s76
      %p87 = scmp.eq.s32.totalorder %s20, 0
      %p88 = por %p86, %p87
      %p89 = scmp.ne.s32.totalorder %s75, %s76
      %p90 = scmp.eq.s32.totalorder %s21, 1
      %p91 = por %p89, %p90
      %p93 = scmp.ne.s32.totalorder %s76, %s92
      %p94 = scmp.eq.s32.totalorder %s21, 0
      %p95 = por %p93, %p94
      %p96 = scmp.le.s32.totalorder 1, %s15
      %p97 = scmp.lt.s32.totalorder %s15, 3
      %p98 = pnand %p96, %p97
      %p99 = pneg %p98
      // Predicated region
      $region9: #{tpu_custom_call.1} parent=5 // pred_check
        _
      $region10: #{tpu_custom_call.1} parent=5 // pred_check_branch
        %101 = sbr.rel (%p98) target = $region12
      $region11: #{tpu_custom_call.1} parent=5 // pred_region
        %s102 = ssub.s32 %s15, 1
        // Predicated region
        $region13: #{tpu_custom_call.1} parent=11 // pred_check
          %p103 = pneg %p62
        $region14: #{tpu_custom_call.1} parent=11 // pred_check_branch
          %105 = sbr.rel (%p103) target = $region16
        $region15: #{tpu_custom_call.1} parent=11 // pred_region
          %s107 = ssub.s32 3072, 3072
          %108 = vsyncadd [#allocation6], %s107
          %s109 = sshll.u32 [#allocation5], 4
          %s110 = int_to_ptr.vmem [resolvable:$true] %s109
          %115 = dma.hbm_to_vmem [thread:$0]  %s1, 3072, %s110, [#allocation6], 384, 384, 24
        $region16: #{tpu_custom_call.1} parent=11 // pred_fallthru
          _
      $region12: #{tpu_custom_call.1} parent=5 // pred_fallthru
        _
      %p116 = scmp.lt.s32.totalorder %s15, 2
      // Predicated region
      $region17: #{tpu_custom_call.1} parent=5 // pred_check
        %p117 = pneg %p116
      $region18: #{tpu_custom_call.1} parent=5 // pred_check_branch
        %119 = sbr.rel (%p117) target = $region20
      $region19: #{tpu_custom_call.1} parent=5 // pred_region
        // Predicated region
        $region21: #{tpu_custom_call.1} parent=19 // pred_check
          %p120 = pneg %p35
        $region22: #{tpu_custom_call.1} parent=19 // pred_check_branch
          %122 = sbr.rel (%p120) target = $region24
        $region23: #{tpu_custom_call.1} parent=19 // pred_region
          %s123 = sand.u32 %s25, 1
          %s124 = scalar_lea.sflag [#allocation3], %s123
          %s125 = sand.u32 %s25, 1
          %s126 = smul.addr %s125, 8
          %s127 = scalar_lea.vmem [#allocation2], %s126
          %s129 = ssub.s32 128, 128
          %130 = vsyncadd %s124, %s129
          %s131 = smul.addr %s15, 128
          %s132 = scalar_lea.hbm %s0, %s131
          %s134 = sshll.u32 %s127, 4
          %s135 = int_to_ptr.vmem [resolvable:$true] %s134
          %137 = dma.hbm_to_vmem [thread:$0]  %s132, 128, %s135, %s124
        $region24: #{tpu_custom_call.1} parent=19 // pred_fallthru
          _
      $region20: #{tpu_custom_call.1} parent=5 // pred_fallthru
        _
      %p138 = scmp.le.s32.totalorder 1, %s15
      %p139 = scmp.lt.s32.totalorder %s15, 3
      %p140 = pnand %p138, %p139
      %p141 = pneg %p140
      // Predicated region
      $region25: #{tpu_custom_call.1} parent=5 // pred_check
        _
      $region26: #{tpu_custom_call.1} parent=5 // pred_check_branch
        %143 = sbr.rel (%p140) target = $region28
      $region27: #{tpu_custom_call.1} parent=5 // pred_region
        %s144 = ssub.s32 %s15, 1
        %s145 = sand.u32 %s28, 1
        %s146 = scalar_lea.sflag [#allocation3], %s145
        %s147 = sand.u32 %s28, 1
        %s148 = smul.addr %s147, 8
        %s149 = scalar_lea.vmem [#allocation2], %s148
        // Predicated region
        $region29: #{tpu_custom_call.1} parent=27 // pred_check
          %p150 = pneg %p41
        $region30: #{tpu_custom_call.1} parent=27 // pred_check_branch
          %152 = sbr.rel (%p150) target = $region32
        $region31: #{tpu_custom_call.1} parent=27 // pred_region
          %153 = dma.done %s146, 128
        $region32: #{tpu_custom_call.1} parent=27 // pred_fallthru
          _
        // Predicated region
        $region33: #{tpu_custom_call.1} parent=27 // pred_check
          %p154 = pneg %p62
        $region34: #{tpu_custom_call.1} parent=27 // pred_check_branch
          %156 = sbr.rel (%p154) target = $region36
        $region35: #{tpu_custom_call.1} parent=27 // pred_region
          %157 = dma.done [#allocation6], 3072
        $region36: #{tpu_custom_call.1} parent=27 // pred_fallthru
          _
        %s158 = sand.u32 %s28, 1
        %s159 = scalar_lea.sflag [#allocation3], %s158
        %s160 = sand.u32 %s28, 1
        %s161 = smul.addr %s160, 8
        %s162 = scalar_lea.vmem [#allocation2], %s161
        %p163 = pneg %p41
        %p164 = pneg %p38
        %p165 = pneg %p62
        %p166 = pneg %p59
        %p167 = pneg %p88
        %p168 = pneg %p85
        %s169 = sand.u32 %s75, 1
        %s170 = scalar_lea.sflag [#allocation4], %s169
        %s171 = sand.u32 %s75, 1
        %s172 = smul.addr %s171, 24
        %s173 = scalar_lea.vmem [#allocation7], %s172
        %v174 = vld [vmem:[%s149] sm:$0xff]
        %v175 = vld [vmem:[#allocation5] sm:$0xff]
        %v176 = vld [vmem:[#allocation5 + $0x8] sm:$0xff]
        %v177 = vld [vmem:[#allocation5 + $0x10] sm:$0xff]
        %v178 = vld [vmem:[#allocation5 + $0x18] sm:$0xff]
        %v179 = vld [vmem:[#allocation5 + $0x20] sm:$0xff]
        %v180 = vld [vmem:[#allocation5 + $0x28] sm:$0xff]
        %v181 = vld [vmem:[#allocation5 + $0x30] sm:$0xff]
        %v182 = vld [vmem:[#allocation5 + $0x38] sm:$0xff]
        %v183 = vld [vmem:[#allocation5 + $0x40] sm:$0xff]
        %v184 = vld [vmem:[#allocation5 + $0x48] sm:$0xff]
        %v185 = vld [vmem:[#allocation5 + $0x50] sm:$0xff]
        %v186 = vld [vmem:[#allocation5 + $0x58] sm:$0xff]
        %v187 = vld [vmem:[#allocation5 + $0x60] sm:$0xff]
        %v188 = vld [vmem:[#allocation5 + $0x68] sm:$0xff]
        %v189 = vld [vmem:[#allocation5 + $0x70] sm:$0xff]
        %v190 = vld [vmem:[#allocation5 + $0x78] sm:$0xff]
        %v191 = vld [vmem:[#allocation5 + $0x80] sm:$0xff]
        %v192 = vld [vmem:[#allocation5 + $0x88] sm:$0xff]
        %v193 = vld [vmem:[#allocation5 + $0x90] sm:$0xff]
        %v194 = vld [vmem:[#allocation5 + $0x98] sm:$0xff]
        %v195 = vld [vmem:[#allocation5 + $0xa0] sm:$0xff]
        %v196 = vld [vmem:[#allocation5 + $0xa8] sm:$0xff]
        %v197 = vld [vmem:[#allocation5 + $0xb0] sm:$0xff]
        %v198 = vld [vmem:[#allocation5 + $0xb8] sm:$0xff]
        %vm199 = vcmask 523264
        %v201 = vsel %vm199, %v174, 0
        %203 = vmatprep.subr.mxu0 0.0
        %204 = vmatpush1.msra.mxu0 0.0
        %205 = vmatprep.subr.mxu0 0.0
        %206 = vmatpush1.msra.mxu0 0.0
        %207 = vmatprep.subr.mxu0 0.0
        %208 = vmatpush1.msra.mxu0 0.0
        %209 = vmatprep.subr.mxu0 0.0
        %210 = vmatpush1.msra.mxu0 0.0
        %211 = vmatprep.subr.mxu0 0.0
        %212 = vmatpush1.msra.mxu0 0.0
        %213 = vmatprep.subr.mxu0 0.0
        %214 = vmatpush1.msra.mxu0 0.0
        %215 = vmatprep.subr.mxu0 0.0
        %216 = vmatpush1.msra.mxu0 0.0
        %217 = vmatprep.subr.mxu0 0.0
        %218 = vmatpush1.msra.mxu0 0.0
        %219 = vmatprep.subr.mxu0 %v197
        %220 = vmatpush1.msra.mxu0 %v196
        %221 = vmatprep.subr.mxu0 %v194
        %222 = vmatpush1.msra.mxu0 %v193
        %223 = vmatprep.subr.mxu0 %v191
        %224 = vmatpush1.msra.mxu0 %v190
        %225 = vmatprep.subr.mxu0 %v188
        %226 = vmatpush1.msra.mxu0 %v187
        %227 = vmatprep.subr.mxu0 %v185
        %228 = vmatpush1.msra.mxu0 %v184
        %229 = vmatprep.subr.mxu0 %v182
        %230 = vmatpush1.msra.mxu0 %v181
        %231 = vmatprep.subr.mxu0 %v179
        %232 = vmatpush1.msra.mxu0 %v178
        %233 = vmatprep.subr.mxu0 %v176
        %234 = vmatpush1.msra.mxu0 %v175
        %235 = vmatprep.subr.mxu0 0.0
        %236 = vmatpush2.msra.mxu0 0.0
        %237 = vmatprep.subr.mxu0 0.0
        %238 = vmatpush2.msra.mxu0 0.0
        %239 = vmatprep.subr.mxu0 0.0
        %240 = vmatpush2.msra.mxu0 0.0
        %241 = vmatprep.subr.mxu0 0.0
        %242 = vmatpush2.msra.mxu0 0.0
        %243 = vmatprep.subr.mxu0 0.0
        %244 = vmatpush2.msra.mxu0 0.0
        %245 = vmatprep.subr.mxu0 0.0
        %246 = vmatpush2.msra.mxu0 0.0
        %247 = vmatprep.subr.mxu0 0.0
        %248 = vmatpush2.msra.mxu0 0.0
        %249 = vmatprep.subr.mxu0 0.0
        %250 = vmatpush2.msra.mxu0 0.0
        %251 = vmatprep.subr.mxu0 0.0
        %252 = vmatpush2.msra.mxu0 0.0
        %253 = vmatprep.subr.mxu0 0.0
        %254 = vmatpush2.msra.mxu0 0.0
        %255 = vmatprep.subr.mxu0 0.0
        %256 = vmatpush2.msra.mxu0 0.0
        %257 = vmatprep.subr.mxu0 0.0
        %258 = vmatpush2.msra.mxu0 0.0
        %259 = vmatprep.subr.mxu0 0.0
        %260 = vmatpush2.msra.mxu0 0.0
        %261 = vmatprep.subr.mxu0 0.0
        %262 = vmatpush2.msra.mxu0 0.0
        %263 = vmatprep.subr.mxu0 0.0
        %264 = vmatpush2.msra.mxu0 0.0
        %265 = vmatprep.subr.mxu0 0.0
        %266 = vmatpush2.msra.mxu0 0.0
        %267 = vmatprep.mubr.f32.mxu0 0.0
        %268 = vmatmul.mubr.f32.gmra.mxu0 %v201
        %v269 = vpop.f32.mrf.mxu0
        %v270 = vadd.f32 0.0, %v269
        %v271 = vpop.f32.mrf.mxu0
        %v272 = vadd.f32 0.0, %v271
        %273 = vdwg.mxu0
        %274 = vmatprep.subr.mxu0 0.0
        %275 = vmatpush1.msra.mxu0 0.0
        %276 = vmatprep.subr.mxu0 0.0
        %277 = vmatpush1.msra.mxu0 0.0
        %278 = vmatprep.subr.mxu0 0.0
        %279 = vmatpush1.msra.mxu0 0.0
        %280 = vmatprep.subr.mxu0 0.0
        %281 = vmatpush1.msra.mxu0 0.0
        %282 = vmatprep.subr.mxu0 0.0
        %283 = vmatpush1.msra.mxu0 0.0
        %284 = vmatprep.subr.mxu0 0.0
        %285 = vmatpush1.msra.mxu0 0.0
        %286 = vmatprep.subr.mxu0 0.0
        %287 = vmatpush1.msra.mxu0 0.0
        %288 = vmatprep.subr.mxu0 0.0
        %289 = vmatpush1.msra.mxu0 0.0
        %290 = vmatprep.subr.mxu0 0.0
        %291 = vmatpush1.msra.mxu0 %v198
        %292 = vmatprep.subr.mxu0 0.0
        %293 = vmatpush1.msra.mxu0 %v195
        %294 = vmatprep.subr.mxu0 0.0
        %295 = vmatpush1.msra.mxu0 %v192
        %296 = vmatprep.subr.mxu0 0.0
        %297 = vmatpush1.msra.mxu0 %v189
        %298 = vmatprep.subr.mxu0 0.0
        %299 = vmatpush1.msra.mxu0 %v186
        %300 = vmatprep.subr.mxu0 0.0
        %301 = vmatpush1.msra.mxu0 %v183
        %302 = vmatprep.subr.mxu0 0.0
        %303 = vmatpush1.msra.mxu0 %v180
        %304 = vmatprep.subr.mxu0 0.0
        %305 = vmatpush1.msra.mxu0 %v177
        %306 = vmatprep.subr.mxu0 0.0
        %307 = vmatpush2.msra.mxu0 0.0
        %308 = vmatprep.subr.mxu0 0.0
        %309 = vmatpush2.msra.mxu0 0.0
        %310 = vmatprep.subr.mxu0 0.0
        %311 = vmatpush2.msra.mxu0 0.0
        %312 = vmatprep.subr.mxu0 0.0
        %313 = vmatpush2.msra.mxu0 0.0
        %314 = vmatprep.subr.mxu0 0.0
        %315 = vmatpush2.msra.mxu0 0.0
        %316 = vmatprep.subr.mxu0 0.0
        %317 = vmatpush2.msra.mxu0 0.0
        %318 = vmatprep.subr.mxu0 0.0
        %319 = vmatpush2.msra.mxu0 0.0
        %320 = vmatprep.subr.mxu0 0.0
        %321 = vmatpush2.msra.mxu0 0.0
        %322 = vmatprep.subr.mxu0 0.0
        %323 = vmatpush2.msra.mxu0 0.0
        %324 = vmatprep.subr.mxu0 0.0
        %325 = vmatpush2.msra.mxu0 0.0
        %326 = vmatprep.subr.mxu0 0.0
        %327 = vmatpush2.msra.mxu0 0.0
        %328 = vmatprep.subr.mxu0 0.0
        %329 = vmatpush2.msra.mxu0 0.0
        %330 = vmatprep.subr.mxu0 0.0
        %331 = vmatpush2.msra.mxu0 0.0
        %332 = vmatprep.subr.mxu0 0.0
        %333 = vmatpush2.msra.mxu0 0.0
        %334 = vmatprep.subr.mxu0 0.0
        %335 = vmatpush2.msra.mxu0 0.0
        %336 = vmatprep.subr.mxu0 0.0
        %337 = vmatpush2.msra.mxu0 0.0
        %338 = vmatprep.mubr.f32.mxu0 0.0
        %339 = vmatmul.mubr.f32.gmra.mxu0 %v201
        %v340 = vpop.f32.mrf.mxu0
        %v341 = vadd.f32 0.0, %v340
        %v342 = vpop.f32.mrf.mxu0
        %343 = vdwg.mxu0
        %344 = vst [vmem:[%s173] sm:$0xff] %v270
        %345 = vst [vmem:[%s173 + $0x8] sm:$0xff] %v272
        %vm346 = vcmask 556032
        %347 = vst.msk [vmem:[%s173 + $0x10] sm:$0xff] %vm346, %v341
        %s348 = sand.u32 %s75, 1
        %s349 = scalar_lea.sflag [#allocation4], %s348
        %s350 = sand.u32 %s75, 1
        %s351 = smul.addr %s350, 24
        %s352 = scalar_lea.vmem [#allocation7], %s351
        // Predicated region
        $region37: #{tpu_custom_call.1} parent=27 // pred_check
          %p353 = pneg %p85
        $region38: #{tpu_custom_call.1} parent=27 // pred_check_branch
          %355 = sbr.rel (%p353) target = $region40
        $region39: #{tpu_custom_call.1} parent=27 // pred_region
          %s357 = ssub.s32 384, 384
          %358 = vsyncadd %s349, %s357
          %s359 = smul.addr %s20, 3
          %s360 = smul.addr %s359, 128
          %s361 = scalar_lea.hbm %s2, %s360
          %s363 = sshll.u32 %s352, 4
          %s364 = int_to_ptr.vmem [resolvable:$true] %s363
          %366 = dma.vmem_to_hbm [thread:$0]  %s364, 384, %s361, %s349
        $region40: #{tpu_custom_call.1} parent=27 // pred_fallthru
          _
      $region28: #{tpu_custom_call.1} parent=5 // pred_fallthru
        _
      %p367 = scmp.le.s32.totalorder 2, %s15
      // Predicated region
      $region41: #{tpu_custom_call.1} parent=5 // pred_check
        %p368 = pneg %p367
      $region42: #{tpu_custom_call.1} parent=5 // pred_check_branch
        %370 = sbr.rel (%p368) target = $region44
      $region43: #{tpu_custom_call.1} parent=5 // pred_region
        %s371 = ssub.s32 %s15, 2
        // Predicated region
        $region45: #{tpu_custom_call.1} parent=43 // pred_check
          %p372 = pneg %p91
        $region46: #{tpu_custom_call.1} parent=43 // pred_check_branch
          %374 = sbr.rel (%p372) target = $region48
        $region47: #{tpu_custom_call.1} parent=43 // pred_region
          %s375 = sand.u32 %s76, 1
          %s376 = scalar_lea.sflag [#allocation4], %s375
          %s377 = sand.u32 %s76, 1
          %s378 = smul.addr %s377, 24
          %s379 = scalar_lea.vmem [#allocation7], %s378
          %380 = dma.done %s376, 384
        $region48: #{tpu_custom_call.1} parent=43 // pred_fallthru
          _
      $region44: #{tpu_custom_call.1} parent=5 // pred_fallthru
        _
    $region6: #{tpu_custom_call.1} parent=1 // loop_footer
      %s19 = sadd.s32 1, %s15
    $region7: #{tpu_custom_call.1} parent=1 // loop_footer_branch
      %14 = sbr.rel target = $region3
    $region8: #{tpu_custom_call.1} parent=1 // loop_exit
      _
    %381 = vsyncpa [#allocation3], 1
    %s382 = scalar_lea.sflag [#allocation3], 1
    %383 = vsyncpa %s382, 1
    %384 = vsyncpa [#allocation6], 1
    %385 = vsyncpa [#allocation4], 1
    %s386 = scalar_lea.sflag [#allocation4], 1
    %387 = vsyncpa %s386, 1

</llo_original>
